<compile_context>
chip_gen: v5e
topology: v5e:2x2
jax: 0.10.0
libtpu: 0.0.40
codegen_flags: <defaults>
</compile_context>

<pallas_src>
import functools

import jax
import jax.numpy as jnp
from jax.experimental import pallas as pl
from jax.experimental.pallas import tpu as pltpu

_PLAN_BUDGET = 28 * 1024 * 1024   # VMEM working-set target (fits every TPU gen)
_VMEM_LIMIT = 40 * 1024 * 1024    # raise v5e's 16 MiB default; well under v7x physical
_TM_CAP = 512
_TK_CAP = 1024


def _round_up(x, m):
    return ((x + m - 1) // m) * m


# ----------------------------------------------------------------------------
# Kernels
# ----------------------------------------------------------------------------
def _proj_kernel_single(x_ref, w_ref, b_ref, o_ref):
    """Whole K reduction in one MXU pass; weight block is VMEM-resident."""
    acc = jnp.dot(x_ref[...], w_ref[...], preferred_element_type=jnp.float32)
    o_ref[...] = (acc + b_ref[...]).astype(o_ref.dtype)


def _proj_kernel_acc(x_ref, w_ref, b_ref, o_ref, acc_ref):
    """K tiled along the last ("arbitrary") grid axis; accumulate in f32 VMEM."""
    k = pl.program_id(2)
    prod = jnp.dot(x_ref[...], w_ref[...], preferred_element_type=jnp.float32)

    @pl.when(k == 0)
    def _():
        acc_ref[...] = prod            # direct write: no zero-init + add pass

    @pl.when(k > 0)
    def _():
        acc_ref[...] += prod

    @pl.when(k == pl.num_programs(2) - 1)
    def _():
        o_ref[...] = (acc_ref[...] + b_ref[...]).astype(o_ref.dtype)


# ----------------------------------------------------------------------------
# Tiling plan
# ----------------------------------------------------------------------------
def _plan_tiles(M, K, Np, x_isz, w_isz, o_isz):
    """Pick (tm, tk, pad_k). tk == K  =>  resident weight, single reduction step."""
    # Preferred: whole [K, Np] weight stays in VMEM (double-buffered), no accumulator.
    rem = _PLAN_BUDGET - 2 * K * Np * w_isz
    per_row = 2 * (K * x_isz + Np * o_isz)
    if rem > 0:
        tm = min(_TM_CAP, rem // per_row)
        if tm >= M:
            return M, K, False
        if tm >= 8:
            return int(tm // 8) * 8, K, False

    # Fallback (very large nf * target_window): tile K, accumulate across steps.
    tm = M if M <= _TM_CAP else _TM_CAP
    max_tm = (_PLAN_BUDGET // 2) // (Np * (2 * o_isz + 4))   # out double-buf + f32 acc
    if tm > max_tm:
        tm = max(8, int(max_tm // 8) * 8)
    fixed = tm * Np * (2 * o_isz + 4)
    per_k = 2 * (tm * x_isz + Np * w_isz)
    tk = max(128, min(_TK_CAP, K, (_PLAN_BUDGET - fixed) // per_k))
    tk = int(tk // 128) * 128
    for cand in range(tk, 0, -128):          # prefer a tk dividing K: no x padding
        if K % cand == 0:
            return tm, cand, False
    return tm, tk, True


# ----------------------------------------------------------------------------
# Batched projection: out[v, m, :] = x[m, v, :] @ w[v] + b[v]
# ----------------------------------------------------------------------------
def _batched_projection(x, w, b, *, out_dtype, compute_dtype=None):
    """
    x: [M, V, K]  (vars along the middle, strided, axis; V == 1 for shared head)
    w: [V, K, N]
    b: [V, N]
    Returns [V, M, N] in `out_dtype`.
    """
    M, V, K = x.shape
    N = w.shape[-1]
    if compute_dtype is not None:
        x = x.astype(compute_dtype)
        w = w.astype(compute_dtype)

    # Lane-dense weight / output: always round N up to a multiple of 128.
    Np = _round_up(N, 128)
    if Np != N:
        w = jnp.pad(w, ((0, 0), (0, 0), (0, Np - N)))
        b = jnp.pad(b, ((0, 0), (0, Np - N)))
    b = b.reshape(V, 1, Np).astype(jnp.float32)

    x_isz = jnp.dtype(x.dtype).itemsize
    w_isz = jnp.dtype(w.dtype).itemsize
    o_isz = jnp.dtype(out_dtype).itemsize
    tm, tk, pad_k = _plan_tiles(M, K, Np, x_isz, w_isz, o_isz)

    # v7x megacore: make sure both TensorCores get at least one parallel tile.
    if V == 1 and tm >= M and M >= 16:
        tm = _round_up(-(-M // 2), 8)

    Kp = K
    if pad_k and K % tk:
        # Rare: huge, non-128-divisible nf that also overflows the resident plan.
        # TODO(synk): mask the K tail in-kernel instead of materializing a padded x.
        Kp = _round_up(K, tk)
        x = jnp.pad(x, ((0, 0), (0, 0), (0, Kp - K)))
        w = jnp.pad(w, ((0, 0), (0, Kp - K), (0, 0)))

    grid = (V, -(-M // tm), Kp // tk)
    single_k = grid[2] == 1
    kernel = _proj_kernel_single if single_k else _proj_kernel_acc
    scratch = [] if single_k else [pltpu.VMEM((tm, Np), jnp.float32)]

    out = pl.pallas_call(
        kernel,
        out_shape=jax.ShapeDtypeStruct((V, M, Np), out_dtype),
        grid=grid,
        in_specs=[
            # x rows for var v (strided DMA over the var axis; no transpose/pad).
            pl.BlockSpec((tm, None, tk), lambda v, i, k: (i, v, k)),
            # weight: constant block index across row tiles -> fetched once / resident.
            pl.BlockSpec((None, tk, Np), lambda v, i, k: (v, k, 0)),
            # bias
            pl.BlockSpec((None, 1, Np), lambda v, i, k: (v, 0, 0)),
        ],
        out_specs=pl.BlockSpec((None, tm, Np), lambda v, i, k: (v, i, 0)),
        scratch_shapes=scratch,
        compiler_params=pltpu.CompilerParams(
            dimension_semantics=("parallel", "parallel", "arbitrary"),
            vmem_limit_bytes=_VMEM_LIMIT),
        cost_estimate=pl.CostEstimate(
            flops=2 * V * M * K * Np,
            transcendentals=0,
            bytes_accessed=int(M * V * K * x_isz + V * Kp * Np * w_isz
                               + V * M * Np * o_isz)),
    )(x, w, b)

    return out[..., :N] if Np != N else out


# ----------------------------------------------------------------------------
# UnPatchify1D forward
# ----------------------------------------------------------------------------
@functools.partial(jax.jit, static_argnames=("individual", "compute_dtype"))
def unpatchify1d(x, weight, bias, individual, compute_dtype=None):
    """
    x:      [B, n_vars, d_model, patch_num]
    weight: individual -> [n_vars, nf, target_window]; shared -> [nf, target_window]
            (torch nn.Linear.weight transposed)
    bias:   individual -> [n_vars, target_window];     shared -> [target_window]
    returns [B, target_window, n_vars]
    """
    B, n_vars, d_model, patch_num = x.shape
    nf = d_model * patch_num
    out_dtype = x.dtype
    # Dropout(head_dropout) is identity at inference.

    if individual:
        x3 = x.reshape(B, n_vars, nf)                         # free view: [M=B, V, nf]
        out = _batched_projection(x3, weight, bias,
                                  out_dtype=out_dtype,
                                  compute_dtype=compute_dtype)  # [V, B, tw]
        return out.transpose(1, 2, 0)                         # [B, tw, V]
    else:
        x3 = x.reshape(B * n_vars, 1, nf)                     # free view: [M=B*V, 1, nf]
        out = _batched_projection(x3, weight[None], bias[None],
                                  out_dtype=out_dtype,
                                  compute_dtype=compute_dtype)  # [1, B*V, tw]
        out = out.reshape(B, n_vars, weight.shape[-1])        # [B, V, tw]
        return out.transpose(0, 2, 1)                         # [B, tw, V]


if __name__ == "__main__":
    key = jax.random.PRNGKey(0)
    B, n_vars, d_model, patch_num = 2, 4, 8, 4
    nf = d_model * patch_num            # 32
    target_window = 16

    kx, kw, kb, kw2, kb2 = jax.random.split(key, 5)
    x = jax.random.normal(kx, (B, n_vars, d_model, patch_num), jnp.float32)

    # nn.Linear-style init (uniform in [-1/sqrt(nf), 1/sqrt(nf)])
    bound = 1.0 / (nf ** 0.5)
    w_shared = jax.random.uniform(kw, (nf, target_window), jnp.float32, -bound, bound)
    b_shared = jax.random.uniform(kb, (target_window,), jnp.float32, -bound, bound)
    w_ind = jax.random.uniform(kw2, (n_vars, nf, target_window), jnp.float32, -bound, bound)
    b_ind = jax.random.uniform(kb2, (n_vars, target_window), jnp.float32, -bound, bound)

    out_shared = jax.block_until_ready(
        unpatchify1d(x, w_shared, b_shared, individual=False))
    out_ind = jax.block_until_ready(
        unpatchify1d(x, w_ind, b_ind, individual=True))
    out_bf16 = jax.block_until_ready(
        unpatchify1d(x, w_shared, b_shared, individual=False,
                     compute_dtype=jnp.bfloat16))

    # pure-JAX reference
    xf = x.reshape(B, n_vars, nf)
    ref_shared = (xf @ w_shared + b_shared).transpose(0, 2, 1)
    ref_ind = (jnp.einsum('bvn,vnt->bvt', xf, w_ind) + b_ind[None]).transpose(0, 2, 1)

    assert out_shared.shape == (B, target_window, n_vars)
    assert out_ind.shape == (B, target_window, n_vars)
    assert jnp.allclose(out_shared, ref_shared, atol=1e-5, rtol=1e-5)
    assert jnp.allclose(out_ind, ref_ind, atol=1e-5, rtol=1e-5)
    assert jnp.allclose(out_bf16, ref_shared, atol=5e-2, rtol=5e-2)
    print("KERNEL_OK")
</pallas_src>

<mosaic_0001>
module attributes {stable_mosaic.version = 11 : i64} {
  func.func @_proj_kernel_single(%arg0: i32, %arg1: i32, %arg2: i32, %arg3: memref<8x1x32xf32, #tpu.memory_space<vmem>>, %arg4: memref<1x32x128xf32, #tpu.memory_space<vmem>>, %arg5: memref<1x1x128xf32, #tpu.memory_space<vmem>>, %arg6: memref<1x8x128xf32, #tpu.memory_space<vmem>>) attributes {dimension_semantics = [#tpu.dimension_semantics<parallel>, #tpu.dimension_semantics<parallel>, #tpu.dimension_semantics<arbitrary>], iteration_bounds = array<i64: 1, 1, 1>, scalar_prefetch = 0 : i64, scratch_operands = 0 : i64, tpu.core_type = #tpu.core_type<tc>, window_params = [{transform_indices = @transform_0, window_bounds = array<i64: 8, 1, 32>}, {transform_indices = @transform_1, window_bounds = array<i64: 1, 32, 128>}, {transform_indices = @transform_2, window_bounds = array<i64: 1, 1, 128>}, {transform_indices = @transform_3, window_bounds = array<i64: 1, 8, 128>}]} {
    %c0 = arith.constant 0 : index
    %c0_0 = arith.constant 0 : index
    %c0_1 = arith.constant 0 : index
    %0 = vector.load %arg3[%c0, %c0_0, %c0_1] : memref<8x1x32xf32, #tpu.memory_space<vmem>>, vector<8x1x32xf32>
    %1 = vector.shape_cast %0 : vector<8x1x32xf32> to vector<8x32xf32>
    %c0_2 = arith.constant 0 : index
    %c0_3 = arith.constant 0 : index
    %c0_4 = arith.constant 0 : index
    %2 = vector.load %arg4[%c0_2, %c0_3, %c0_4] : memref<1x32x128xf32, #tpu.memory_space<vmem>>, vector<1x32x128xf32>
    %3 = vector.shape_cast %2 : vector<1x32x128xf32> to vector<32x128xf32>
    %cst = arith.constant dense<0.000000e+00> : vector<8x128xf32>
    %4 = tpu.matmul %1, %3, %cst {dimension_numbers = #tpu.dot_dimension_numbers<[1], [0], [0], [1], [0, 0, 1, 1], [], []>} : vector<8x32xf32>, vector<32x128xf32>, vector<8x128xf32> -> vector<8x128xf32>
    %c0_5 = arith.constant 0 : index
    %c0_6 = arith.constant 0 : index
    %c0_7 = arith.constant 0 : index
    %5 = vector.load %arg5[%c0_5, %c0_6, %c0_7] : memref<1x1x128xf32, #tpu.memory_space<vmem>>, vector<1x1x128xf32>
    %6 = vector.shape_cast %5 : vector<1x1x128xf32> to vector<1x128xf32>
    %7 = vector.broadcast %6 : vector<1x128xf32> to vector<8x128xf32>
    %8 = arith.addf %4, %7 : vector<8x128xf32>
    %c0_8 = arith.constant 0 : index
    %c0_9 = arith.constant 0 : index
    %c0_10 = arith.constant 0 : index
    %9 = vector.load %arg6[%c0_8, %c0_9, %c0_10] : memref<1x8x128xf32, #tpu.memory_space<vmem>>, vector<1x8x128xf32>
    %10 = vector.shape_cast %9 : vector<1x8x128xf32> to vector<8x128xf32>
    %11 = vector.shape_cast %8 : vector<8x128xf32> to vector<1x8x128xf32>
    tpu.vector_store %arg6[%c0_8, %c0_9, %c0_10], %11 {strides = array<i32>} : memref<1x8x128xf32, #tpu.memory_space<vmem>>, vector<1x8x128xf32>,
    return
  }
  func.func @transform_0(%arg0: i32, %arg1: i32, %arg2: i32) -> (i32, i32, i32) {
    %c0_i32 = arith.constant 0 : i32
    return %arg1, %arg0, %arg2 : i32, i32, i32
  }
  func.func @transform_1(%arg0: i32, %arg1: i32, %arg2: i32) -> (i32, i32, i32) {
    %c0_i32 = arith.constant 0 : i32
    %c0_i32_0 = arith.constant 0 : i32
    return %arg0, %arg2, %c0_i32 : i32, i32, i32
  }
  func.func @transform_2(%arg0: i32, %arg1: i32, %arg2: i32) -> (i32, i32, i32) {
    %c0_i32 = arith.constant 0 : i32
    %c0_i32_0 = arith.constant 0 : i32
    %c0_i32_1 = arith.constant 0 : i32
    return %arg0, %c0_i32, %c0_i32_0 : i32, i32, i32
  }
  func.func @transform_3(%arg0: i32, %arg1: i32, %arg2: i32) -> (i32, i32, i32) {
    %c0_i32 = arith.constant 0 : i32
    %c0_i32_0 = arith.constant 0 : i32
    return %arg0, %arg1, %c0_i32 : i32, i32, i32
  }
}

</mosaic_0001>

<llo_original>
// kernel: unpatchify1d.1
$region0: #{unpatchify1d.1}
  #allocation0 [shape = 'u32[]', space=smem, size = 0x4, offset = 0x4, fixed_abs, tag = 'smem constant byte address 0x4 - core index']
  #allocation1 [shape = 'u32[72,128]{1,0:T(1,128)}', space=vmem, size = 0x9000, scoped, tag = 'internal scratch']
  %s0 = inlined_call_operand.vmem [shape: f32[8,1,32], index: 0, kind: input, shape index: {}]
  %s1 = inlined_call_operand.vmem [shape: f32[1,32,128], index: 1, kind: input, shape index: {}]
  %s2 = inlined_call_operand.vmem [shape: f32[1,1,128], index: 2, kind: input, shape index: {}]
  %s3 = inlined_call_operand.hbm [shape: f32[1,8,128], index: 3, kind: output, shape index: {}]
  %s4 = sld [smem:[#allocation0]]
  $region22: #{unpatchify1d.1} parent=0
    _
  %s6 = ssub.s32 1, %s4
  %s7 = scalar_select 0, %s6, %s4
  $region1: #{unpatchify1d.1} parent=0
    #allocation2 [shape = 'u8[4096]{0}', space=vmem, size = 0x1000, scoped, tag = 'output window, operand 0, single buffered']
    #allocation3 [shape = 's32[1]{0}', space=sflag, size = 0x4, scoped, tag = 'scoped memory for unpatchify1d.1']
    %8 = vsyncpa [#allocation3], 0
    // Predicated region
    $region2: #{unpatchify1d.1} parent=1 // pred_check
      _
    $region3: #{unpatchify1d.1} parent=1 // pred_check_branch
      %10 = sbr.rel (0) target = $region5
    $region4: #{unpatchify1d.1} parent=1 // pred_region
      _
    $region5: #{unpatchify1d.1} parent=1 // pred_fallthru
      _
    // Predicated region
    $region6: #{unpatchify1d.1} parent=1 // pred_check
      _
    $region7: #{unpatchify1d.1} parent=1 // pred_check_branch
      %12 = sbr.rel (0) target = $region9
    $region8: #{unpatchify1d.1} parent=1 // pred_region
      _
    $region9: #{unpatchify1d.1} parent=1 // pred_fallthru
      _
    // Predicated region
    $region10: #{unpatchify1d.1} parent=1 // pred_check
      _
    $region11: #{unpatchify1d.1} parent=1 // pred_check_branch
      %14 = sbr.rel (0) target = $region13
    $region12: #{unpatchify1d.1} parent=1 // pred_region
      _
    $region13: #{unpatchify1d.1} parent=1 // pred_fallthru
      _
    %v15 = vld [vmem:[%s0] sm:$0x1]
    %v16 = vld [vmem:[%s0 + $0x1] sm:$0x1]
    %v17 = vld [vmem:[%s0 + $0x2] sm:$0x1]
    %v18 = vld [vmem:[%s0 + $0x3] sm:$0x1]
    %v19 = vld [vmem:[%s0 + $0x4] sm:$0x1]
    %v20 = vld [vmem:[%s0 + $0x5] sm:$0x1]
    %v21 = vld [vmem:[%s0 + $0x6] sm:$0x1]
    %v22 = vld [vmem:[%s0 + $0x7] sm:$0x1]
    %v23 = vld [vmem:[%s1] sm:$0xff]
    %v24 = vld [vmem:[%s1 + $0x8] sm:$0xff]
    %v25 = vld [vmem:[%s1 + $0x10] sm:$0xff]
    %v26 = vld [vmem:[%s1 + $0x18] sm:$0xff]
    %v27 = vld [vmem:[%s2] sm:$0x1]
    %v29 = vperm.slane %v27, 0
    %39 = vst [vmem:[#allocation1] ss:$9 sm:$0xff] %v15
    %s40 = scalar_lea.vmem [#allocation1], 1
    %41 = vst [vmem:[%s40] ss:$9 sm:$0xff] %v16
    %s42 = scalar_lea.vmem [#allocation1], 2
    %43 = vst [vmem:[%s42] ss:$9 sm:$0xff] %v17
    %s44 = scalar_lea.vmem [#allocation1], 3
    %45 = vst [vmem:[%s44] ss:$9 sm:$0xff] %v18
    %s46 = scalar_lea.vmem [#allocation1], 4
    %47 = vst [vmem:[%s46] ss:$9 sm:$0xff] %v19
    %s48 = scalar_lea.vmem [#allocation1], 5
    %49 = vst [vmem:[%s48] ss:$9 sm:$0xff] %v20
    %s50 = scalar_lea.vmem [#allocation1], 6
    %51 = vst [vmem:[%s50] ss:$9 sm:$0xff] %v21
    %s52 = scalar_lea.vmem [#allocation1], 7
    %53 = vst [vmem:[%s52] ss:$9 sm:$0xff] %v22
    %v54 = vld [vmem:[#allocation1] sm:$0xff]
    %vm55 = vcmask 261120
    %v56 = vsel %vm55, %v54, 0
    %58 = vmatpush.msra.mxu0 0.0
    %59 = vmatpush.msra.mxu0 0.0
    %60 = vmatpush.msra.mxu0 0.0
    %61 = vmatpush.msra.mxu0 0.0
    %62 = vmatpush.msra.mxu0 0.0
    %63 = vmatpush.msra.mxu0 0.0
    %64 = vmatpush.msra.mxu0 0.0
    %65 = vmatpush.msra.mxu0 0.0
    %66 = vmatpush.msra.mxu0 0.0
    %67 = vmatpush.msra.mxu0 0.0
    %68 = vmatpush.msra.mxu0 0.0
    %69 = vmatpush.msra.mxu0 0.0
    %70 = vmatpush.msra.mxu0 %v26
    %71 = vmatpush.msra.mxu0 %v25
    %72 = vmatpush.msra.mxu0 %v24
    %73 = vmatpush.msra.mxu0 %v23
    %74 = vmatmul.f32.gmra.mxu0 %v56
    %v75 = vpop.f32.mrf.mxu0
    %v76 = vadd.f32 %v29, %v75
    %77 = vdwg.mxu0
    %78 = vst [vmem:[#allocation2] sm:$0xff] %v76
    // Predicated region
    $region14: #{unpatchify1d.1} parent=1 // pred_check
      _
    $region15: #{unpatchify1d.1} parent=1 // pred_check_branch
      %80 = sbr.rel (0) target = $region17
    $region16: #{unpatchify1d.1} parent=1 // pred_region
      %82 = vsyncadd [#allocation3], 0
      %s84 = sshll.u32 [#allocation2], 4
      %s85 = int_to_ptr.vmem [resolvable:$true] %s84
      %s86 = sshll.u32 %s3, 4
      %s87 = int_to_ptr.hbm [resolvable:$true] %s86
      %89 = dma.vmem_to_hbm [thread:$0]  %s85, 128, %s87, [#allocation3]
    $region17: #{unpatchify1d.1} parent=1 // pred_fallthru
      _
    // Predicated region
    $region18: #{unpatchify1d.1} parent=1 // pred_check
      _
    $region19: #{unpatchify1d.1} parent=1 // pred_check_branch
      %91 = sbr.rel (0) target = $region21
    $region20: #{unpatchify1d.1} parent=1 // pred_region
      %93 = dma.done [#allocation3], 128
    $region21: #{unpatchify1d.1} parent=1 // pred_fallthru
      _
    %94 = vsyncpa [#allocation3], 1

</llo_original>
